<compile_context>
chip_gen: v6e
topology: v6e:2x2x1
jax: 0.10.0
libtpu: 0.0.40
codegen_flags: <defaults>
</compile_context>

<pallas_src>
import jax
import jax.numpy as jnp
from jax import lax
from jax.experimental import pallas as pl
from jax.experimental.pallas import tpu as pltpu


def _round_up(x, m):
    return ((x + m - 1) // m) * m


def _make_rps_kernel(n_points):
    NP = int(n_points)

    def kernel(pts_ref, u_ref, slot_ref, sel_ref):
        """Per-batch sampling-index computation (lane-dense layouts).

        pts_ref : (1, 3, Npad)  f32  permuted cloud, coords on sublanes, points on lanes
        u_ref   : (1, 1, NPpad) f32  uniform [0,1) randoms (lane-major)
        slot_ref: (1, 1, Npad)  i32  compaction slot of each permuted point (NP == dropped)
        sel_ref : (1, 1, NPpad) i32  compact index sampled for each output point
        """
        pts = pts_ref[0]                     # (3, Npad)
        n = pts.shape[1]
        np_pad = sel_ref.shape[2]

        # torch.sum(p, dim=2).ne(0): nonzero mask, computed directly in lane
        # orientation from the (3, N) layout (no (N,N) identity "transpose").
        csum = pts[0:1, :] + pts[1:2, :] + pts[2:3, :]        # (1, Npad)
        maskf = (csum != 0.0).astype(jnp.float32)             # (1, Npad), 0/1

        # Inclusive prefix sum of the mask along lanes (== jnp.cumsum) via
        # log2(N) XLU lane rotations — O(N log N), no (N,N) triangular matrix.
        lane = lax.broadcasted_iota(jnp.int32, (1, n), 1)
        rank = maskf
        shift = 1
        while shift < n:
            rolled = pltpu.roll(rank, shift, axis=1)
            rank = rank + jnp.where(lane >= shift, rolled, 0.0)
            shift *= 2

        # Number of nonzero points (f32 accumulation: exact for N < 2**24,
        # far beyond any point-cloud size).
        m = jnp.sum(maskf)

        # Stream-compaction destination of every permuted point; zero-sum
        # points and nonzero points beyond the first NP get the sentinel NP.
        keep = jnp.logical_and(maskf > 0.0, rank <= float(NP))
        slot_ref[0] = jnp.where(keep, rank - 1.0, float(NP)).astype(jnp.int32)

        # Which compacted point each of the NP outputs takes — only the needed
        # branch is executed (pl.when gating).
        @pl.when(m >= float(NP))
        def _():
            # torch.randperm path: first NP nonzero points in permuted order.
            sel_ref[0] = lax.broadcasted_iota(jnp.int32, (1, np_pad), 1)

        @pl.when(m < float(NP))
        def _():
            # torch.randint path: NP uniform-with-replacement draws from the m
            # nonzero points.  (m == 0 would raise in PyTorch's randint; here it
            # yields copies of permuted point 0, itself a zero-sum point.)
            mf = jnp.maximum(m, 1.0)
            u = u_ref[0]                                      # (1, NPpad)
            sel_ref[0] = jnp.minimum(jnp.floor(u * mf), mf - 1.0).astype(jnp.int32)

    return kernel


def random_point_sampling(pred_cloud, partial_cloud=None, *, n_points, key):
    """JAX/Pallas port of GRNet.RandomPointSampling.forward (no learned params)."""
    if partial_cloud is not None:
        pred_cloud = jnp.concatenate([partial_cloud, pred_cloud], axis=1)
    pts = pred_cloud.astype(jnp.float32)
    B, N, C = pts.shape
    assert C == 3
    NP = int(n_points)

    # Lane padding: zero points are filtered by the mask, so zero-padding the
    # point axis is semantically free and makes every lane dim a multiple of 128.
    n_pad = max(128, _round_up(N, 128))
    np_pad = max(128, _round_up(NP, 128))

    k_perm, k_u = jax.random.split(key)
    perm = jax.vmap(lambda k: jax.random.permutation(k, N))(
        jax.random.split(k_perm, B)).astype(jnp.int32)                 # (B, N)
    u = jax.random.uniform(k_u, (B, 1, np_pad), dtype=jnp.float32)     # lane-major

    # Stage 0 (wrapper, per perf review): apply the random permutation with a
    # plain gather and go lane-dense (3, N) for the kernel.
    ptsT = jnp.transpose(pts, (0, 2, 1))                               # (B, 3, N)
    pptsT = jnp.take_along_axis(ptsT, perm[:, None, :], axis=2)        # (B, 3, N)
    pptsT = jnp.pad(pptsT, ((0, 0), (0, 0), (0, n_pad - N)))           # (B, 3, n_pad)

    # Stage 1 (Pallas): mask / rank / branch decision / sampling indices.
    # O(N + NP) VMEM per batch; for large B several batch elements could be
    # packed per grid step to amortize per-step pipeline overhead.
    slot, sel = pl.pallas_call(
        _make_rps_kernel(NP),
        out_shape=(jax.ShapeDtypeStruct((B, 1, n_pad), jnp.int32),
                   jax.ShapeDtypeStruct((B, 1, np_pad), jnp.int32)),
        grid=(B,),
        in_specs=[
            pl.BlockSpec((1, 3, n_pad), lambda b: (b, 0, 0)),
            pl.BlockSpec((1, 1, np_pad), lambda b: (b, 0, 0)),
        ],
        out_specs=(
            pl.BlockSpec((1, 1, n_pad), lambda b: (b, 0, 0)),
            pl.BlockSpec((1, 1, np_pad), lambda b: (b, 0, 0)),
        ),
        compiler_params=pltpu.CompilerParams(
            dimension_semantics=("parallel",)),   # v7x: shard batch over 2 TCs
    )(pptsT, u)

    slot = slot[:, 0, :]        # (B, n_pad)  destination slot per permuted point
    sel = sel[:, 0, :NP]        # (B, NP)     compact index per output point

    # Stage 2 (wrapper, per perf review): exact index scatter/gathers in XLA —
    # replaces the old (NP,N)x(N,3) selection matmuls (no MXU, bit-exact copies).
    b_idx = jnp.arange(B, dtype=jnp.int32)[:, None]
    t_idx = jnp.broadcast_to(jnp.arange(n_pad, dtype=jnp.int32)[None, :], (B, n_pad))
    compact = jnp.zeros((B, NP + 1), jnp.int32).at[b_idx, slot].set(t_idx)[:, :NP]
    out_idx = jnp.take_along_axis(compact, sel, axis=1)                # (B, NP)
    outT = jnp.take_along_axis(pptsT, out_idx[:, None, :], axis=2)     # (B, 3, NP)
    return jnp.transpose(outT, (0, 2, 1))                              # (B, NP, 3)


if __name__ == "__main__":
    import numpy as np

    key = jax.random.PRNGKey(0)
    k1, k2, k3 = jax.random.split(key, 3)

    B, N_PRED, N_PART, N_POINTS = 2, 16, 8, 8   # module __init__(n_points=8)
    pred = jax.random.normal(k1, (B, N_PRED, 3), dtype=jnp.float32)
    part = jax.random.normal(k2, (B, N_PART, 3), dtype=jnp.float32)

    # Batch 1 is sparse: only 5 non-zero points (< n_points) -> with-replacement path.
    keep = jnp.zeros((N_PRED,), dtype=jnp.float32).at[:5].set(1.0)
    pred = pred.at[1].set(pred[1] * keep[:, None])
    part = part.at[1].set(0.0)

    sample = jax.jit(random_point_sampling, static_argnames=("n_points",))
    out = sample(pred, part, n_points=N_POINTS, key=k3)
    out = jax.block_until_ready(out)

    # sanity: shape, every sampled point is an exact copy of a non-zero input point
    full = np.asarray(jnp.concatenate([part, pred], axis=1))
    out_np = np.asarray(out)
    ok = out_np.shape == (B, N_POINTS, 3)
    for b in range(B):
        d = np.abs(out_np[b][:, None, :] - full[b][None, :, :]).max(-1)   # (NP, N)
        ok &= bool((d.min(axis=1) < 1e-5).all())                 # matches an input point
        ok &= bool(np.abs(out_np[b]).sum(axis=1).min() > 1e-6)   # non-zero points only
    assert ok, "sampled points do not match non-zero input points"

    print("KERNEL_OK")
</pallas_src>

<mosaic_0001>
module attributes {stable_mosaic.version = 11 : i64} {
  func.func @kernel(%arg0: i32, %arg1: memref<1x3x128xf32, #tpu.memory_space<vmem>>, %arg2: memref<1x1x128xf32, #tpu.memory_space<vmem>>, %arg3: memref<1x1x128xi32, #tpu.memory_space<vmem>>, %arg4: memref<1x1x128xi32, #tpu.memory_space<vmem>>) attributes {dimension_semantics = [#tpu.dimension_semantics<parallel>], iteration_bounds = array<i64: 2>, scalar_prefetch = 0 : i64, scratch_operands = 0 : i64, tpu.core_type = #tpu.core_type<tc>, window_params = [{transform_indices = @transform_0, window_bounds = array<i64: 1, 3, 128>}, {transform_indices = @transform_1, window_bounds = array<i64: 1, 1, 128>}, {transform_indices = @transform_2, window_bounds = array<i64: 1, 1, 128>}, {transform_indices = @transform_3, window_bounds = array<i64: 1, 1, 128>}]} {
    %c0 = arith.constant 0 : index
    %c0_0 = arith.constant 0 : index
    %c0_1 = arith.constant 0 : index
    %0 = vector.load %arg1[%c0, %c0_0, %c0_1] : memref<1x3x128xf32, #tpu.memory_space<vmem>>, vector<1x3x128xf32>
    %1 = vector.shape_cast %0 : vector<1x3x128xf32> to vector<3x128xf32>
    %2 = vector.extract_strided_slice %1 {offsets = [0, 0], sizes = [1, 128], strides = [1, 1]} : vector<3x128xf32> to vector<1x128xf32>
    %3 = vector.extract_strided_slice %1 {offsets = [1, 0], sizes = [1, 128], strides = [1, 1]} : vector<3x128xf32> to vector<1x128xf32>
    %4 = arith.addf %2, %3 : vector<1x128xf32>
    %5 = vector.extract_strided_slice %1 {offsets = [2, 0], sizes = [1, 128], strides = [1, 1]} : vector<3x128xf32> to vector<1x128xf32>
    %6 = arith.addf %4, %5 : vector<1x128xf32>
    %cst = arith.constant 0.000000e+00 : f32
    %7 = vector.broadcast %cst : f32 to vector<1x128xf32>
    %8 = arith.cmpf one, %6, %7 : vector<1x128xf32>
    %9 = arith.extui %8 : vector<1x128xi1> to vector<1x128xi32>
    %10 = arith.sitofp %9 : vector<1x128xi32> to vector<1x128xf32>
    %11 = tpu.iota {dimensions = array<i32: 1>} : vector<1x128xi32>
    %c1_i32 = arith.constant 1 : i32
    %12 = tpu.dynamic_rotate %10 by %c1_i32 dim 1 : vector<1x128xf32>, i32 -> vector<1x128xf32>
    %c1_i32_2 = arith.constant 1 : i32
    %13 = vector.broadcast %c1_i32_2 : i32 to vector<1x128xi32>
    %14 = arith.cmpi sge, %11, %13 : vector<1x128xi32>
    %cst_3 = arith.constant 0.000000e+00 : f32
    %15 = vector.broadcast %cst_3 : f32 to vector<1x128xf32>
    %16 = arith.select %14, %12, %15 : vector<1x128xi1>, vector<1x128xf32>
    %17 = arith.addf %10, %16 : vector<1x128xf32>
    %c2_i32 = arith.constant 2 : i32
    %18 = tpu.dynamic_rotate %17 by %c2_i32 dim 1 : vector<1x128xf32>, i32 -> vector<1x128xf32>
    %c2_i32_4 = arith.constant 2 : i32
    %19 = vector.broadcast %c2_i32_4 : i32 to vector<1x128xi32>
    %20 = arith.cmpi sge, %11, %19 : vector<1x128xi32>
    %cst_5 = arith.constant 0.000000e+00 : f32
    %21 = vector.broadcast %cst_5 : f32 to vector<1x128xf32>
    %22 = arith.select %20, %18, %21 : vector<1x128xi1>, vector<1x128xf32>
    %23 = arith.addf %17, %22 : vector<1x128xf32>
    %c4_i32 = arith.constant 4 : i32
    %24 = tpu.dynamic_rotate %23 by %c4_i32 dim 1 : vector<1x128xf32>, i32 -> vector<1x128xf32>
    %c4_i32_6 = arith.constant 4 : i32
    %25 = vector.broadcast %c4_i32_6 : i32 to vector<1x128xi32>
    %26 = arith.cmpi sge, %11, %25 : vector<1x128xi32>
    %cst_7 = arith.constant 0.000000e+00 : f32
    %27 = vector.broadcast %cst_7 : f32 to vector<1x128xf32>
    %28 = arith.select %26, %24, %27 : vector<1x128xi1>, vector<1x128xf32>
    %29 = arith.addf %23, %28 : vector<1x128xf32>
    %c8_i32 = arith.constant 8 : i32
    %30 = tpu.dynamic_rotate %29 by %c8_i32 dim 1 : vector<1x128xf32>, i32 -> vector<1x128xf32>
    %c8_i32_8 = arith.constant 8 : i32
    %31 = vector.broadcast %c8_i32_8 : i32 to vector<1x128xi32>
    %32 = arith.cmpi sge, %11, %31 : vector<1x128xi32>
    %cst_9 = arith.constant 0.000000e+00 : f32
    %33 = vector.broadcast %cst_9 : f32 to vector<1x128xf32>
    %34 = arith.select %32, %30, %33 : vector<1x128xi1>, vector<1x128xf32>
    %35 = arith.addf %29, %34 : vector<1x128xf32>
    %c16_i32 = arith.constant 16 : i32
    %36 = tpu.dynamic_rotate %35 by %c16_i32 dim 1 : vector<1x128xf32>, i32 -> vector<1x128xf32>
    %c16_i32_10 = arith.constant 16 : i32
    %37 = vector.broadcast %c16_i32_10 : i32 to vector<1x128xi32>
    %38 = arith.cmpi sge, %11, %37 : vector<1x128xi32>
    %cst_11 = arith.constant 0.000000e+00 : f32
    %39 = vector.broadcast %cst_11 : f32 to vector<1x128xf32>
    %40 = arith.select %38, %36, %39 : vector<1x128xi1>, vector<1x128xf32>
    %41 = arith.addf %35, %40 : vector<1x128xf32>
    %c32_i32 = arith.constant 32 : i32
    %42 = tpu.dynamic_rotate %41 by %c32_i32 dim 1 : vector<1x128xf32>, i32 -> vector<1x128xf32>
    %c32_i32_12 = arith.constant 32 : i32
    %43 = vector.broadcast %c32_i32_12 : i32 to vector<1x128xi32>
    %44 = arith.cmpi sge, %11, %43 : vector<1x128xi32>
    %cst_13 = arith.constant 0.000000e+00 : f32
    %45 = vector.broadcast %cst_13 : f32 to vector<1x128xf32>
    %46 = arith.select %44, %42, %45 : vector<1x128xi1>, vector<1x128xf32>
    %47 = arith.addf %41, %46 : vector<1x128xf32>
    %c64_i32 = arith.constant 64 : i32
    %48 = tpu.dynamic_rotate %47 by %c64_i32 dim 1 : vector<1x128xf32>, i32 -> vector<1x128xf32>
    %c64_i32_14 = arith.constant 64 : i32
    %49 = vector.broadcast %c64_i32_14 : i32 to vector<1x128xi32>
    %50 = arith.cmpi sge, %11, %49 : vector<1x128xi32>
    %cst_15 = arith.constant 0.000000e+00 : f32
    %51 = vector.broadcast %cst_15 : f32 to vector<1x128xf32>
    %52 = arith.select %50, %48, %51 : vector<1x128xi1>, vector<1x128xf32>
    %53 = arith.addf %47, %52 : vector<1x128xf32>
    %54 = vector.shape_cast %10 : vector<1x128xf32> to vector<1x1x128xf32>
    %cst_16 = arith.constant dense<0.000000e+00> : vector<1xf32>
    %55 = vector.multi_reduction <add>, %54, %cst_16 [1, 2] : vector<1x1x128xf32> to vector<1xf32>
    %56 = vector.shape_cast %55 : vector<1xf32> to vector<1x1x1xf32>
    %57 = vector.extract %56[0, 0, 0] : f32 from vector<1x1x1xf32>
    %cst_17 = arith.constant 0.000000e+00 : f32
    %58 = vector.broadcast %cst_17 : f32 to vector<1x128xf32>
    %59 = arith.cmpf ogt, %10, %58 : vector<1x128xf32>
    %cst_18 = arith.constant 8.000000e+00 : f32
    %60 = vector.broadcast %cst_18 : f32 to vector<1x128xf32>
    %61 = arith.cmpf ole, %53, %60 : vector<1x128xf32>
    %62 = arith.andi %59, %61 : vector<1x128xi1>
    %cst_19 = arith.constant 1.000000e+00 : f32
    %63 = vector.broadcast %cst_19 : f32 to vector<1x128xf32>
    %64 = arith.subf %53, %63 : vector<1x128xf32>
    %cst_20 = arith.constant 8.000000e+00 : f32
    %65 = vector.broadcast %cst_20 : f32 to vector<1x128xf32>
    %66 = arith.select %62, %64, %65 : vector<1x128xi1>, vector<1x128xf32>
    %67 = arith.fptosi %66 : vector<1x128xf32> to vector<1x128xi32>
    %c0_21 = arith.constant 0 : index
    %c0_22 = arith.constant 0 : index
    %c0_23 = arith.constant 0 : index
    %68 = vector.load %arg3[%c0_21, %c0_22, %c0_23] : memref<1x1x128xi32, #tpu.memory_space<vmem>>, vector<1x1x128xi32>
    %69 = vector.shape_cast %68 : vector<1x1x128xi32> to vector<1x128xi32>
    %70 = vector.shape_cast %67 : vector<1x128xi32> to vector<1x1x128xi32>
    tpu.vector_store %arg3[%c0_21, %c0_22, %c0_23], %70 {strides = array<i32>} : memref<1x1x128xi32, #tpu.memory_space<vmem>>, vector<1x1x128xi32>,
    %cst_24 = arith.constant 8.000000e+00 : f32
    %71 = arith.cmpf oge, %57, %cst_24 : f32
    %72 = arith.extui %71 : i1 to i32
    %c0_i32 = arith.constant 0 : i32
    %73 = arith.cmpi ne, %72, %c0_i32 : i32
    scf.if %73 {
      %77 = tpu.iota {dimensions = array<i32: 1>} : vector<1x128xi32>
      %c0_27 = arith.constant 0 : index
      %c0_28 = arith.constant 0 : index
      %c0_29 = arith.constant 0 : index
      %78 = vector.load %arg4[%c0_27, %c0_28, %c0_29] : memref<1x1x128xi32, #tpu.memory_space<vmem>>, vector<1x1x128xi32>
      %79 = vector.shape_cast %78 : vector<1x1x128xi32> to vector<1x128xi32>
      %80 = vector.shape_cast %77 : vector<1x128xi32> to vector<1x1x128xi32>
      tpu.vector_store %arg4[%c0_27, %c0_28, %c0_29], %80 {strides = array<i32>} : memref<1x1x128xi32, #tpu.memory_space<vmem>>, vector<1x1x128xi32>,
    } else {
    }
    %cst_25 = arith.constant 8.000000e+00 : f32
    %74 = arith.cmpf olt, %57, %cst_25 : f32
    %75 = arith.extui %74 : i1 to i32
    %c0_i32_26 = arith.constant 0 : i32
    %76 = arith.cmpi ne, %75, %c0_i32_26 : i32
    scf.if %76 {
      %cst_27 = arith.constant 1.000000e+00 : f32
      %77 = arith.maximumf %57, %cst_27 : f32
      %c0_28 = arith.constant 0 : index
      %c0_29 = arith.constant 0 : index
      %c0_30 = arith.constant 0 : index
      %78 = vector.load %arg2[%c0_28, %c0_29, %c0_30] : memref<1x1x128xf32, #tpu.memory_space<vmem>>, vector<1x1x128xf32>
      %79 = vector.shape_cast %78 : vector<1x1x128xf32> to vector<1x128xf32>
      %80 = vector.broadcast %77 : f32 to vector<1x128xf32>
      %81 = arith.mulf %79, %80 : vector<1x128xf32>
      %82 = math.floor %81 : vector<1x128xf32>
      %cst_31 = arith.constant 1.000000e+00 : f32
      %83 = arith.subf %77, %cst_31 : f32
      %84 = vector.broadcast %83 : f32 to vector<1x128xf32>
      %85 = arith.minimumf %82, %84 : vector<1x128xf32>
      %86 = arith.fptosi %85 : vector<1x128xf32> to vector<1x128xi32>
      %c0_32 = arith.constant 0 : index
      %c0_33 = arith.constant 0 : index
      %c0_34 = arith.constant 0 : index
      %87 = vector.load %arg4[%c0_32, %c0_33, %c0_34] : memref<1x1x128xi32, #tpu.memory_space<vmem>>, vector<1x1x128xi32>
      %88 = vector.shape_cast %87 : vector<1x1x128xi32> to vector<1x128xi32>
      %89 = vector.shape_cast %86 : vector<1x128xi32> to vector<1x1x128xi32>
      tpu.vector_store %arg4[%c0_32, %c0_33, %c0_34], %89 {strides = array<i32>} : memref<1x1x128xi32, #tpu.memory_space<vmem>>, vector<1x1x128xi32>,
    } else {
    }
    return
  }
  func.func @transform_0(%arg0: i32) -> (i32, i32, i32) {
    %c0_i32 = arith.constant 0 : i32
    %c0_i32_0 = arith.constant 0 : i32
    %c0_i32_1 = arith.constant 0 : i32
    return %arg0, %c0_i32, %c0_i32_0 : i32, i32, i32
  }
  func.func @transform_1(%arg0: i32) -> (i32, i32, i32) {
    %c0_i32 = arith.constant 0 : i32
    %c0_i32_0 = arith.constant 0 : i32
    %c0_i32_1 = arith.constant 0 : i32
    return %arg0, %c0_i32, %c0_i32_0 : i32, i32, i32
  }
  func.func @transform_2(%arg0: i32) -> (i32, i32, i32) {
    %c0_i32 = arith.constant 0 : i32
    %c0_i32_0 = arith.constant 0 : i32
    %c0_i32_1 = arith.constant 0 : i32
    return %arg0, %c0_i32, %c0_i32_0 : i32, i32, i32
  }
  func.func @transform_3(%arg0: i32) -> (i32, i32, i32) {
    %c0_i32 = arith.constant 0 : i32
    %c0_i32_0 = arith.constant 0 : i32
    %c0_i32_1 = arith.constant 0 : i32
    return %arg0, %c0_i32, %c0_i32_0 : i32, i32, i32
  }
}

</mosaic_0001>

<llo_original>
// kernel: random_point_sampling.1
$region0: #{random_point_sampling.1}
  #allocation0 [shape = 'u32[]', space=smem, size = 0x4, offset = 0x4, fixed_abs, tag = 'smem constant byte address 0x4 - core index']
  #allocation1 [shape = 'u32[144,128]{1,0:T(1,128)}', space=vmem, size = 0x12000, scoped, tag = 'internal scratch']
  %s0 = inlined_call_operand.vmem [shape: f32[2,3,128], index: 0, kind: input, shape index: {}]
  %s1 = inlined_call_operand.vmem [shape: f32[2,1,128], index: 1, kind: input, shape index: {}]
  %s2 = inlined_call_operand.vmem [shape: s32[2,1,128], index: 2, kind: output, shape index: {0}]
  %s3 = inlined_call_operand.vmem [shape: s32[2,1,128], index: 3, kind: output, shape index: {1}]
  %4 = xla_tuple %s2, %s3
  %s5 = sld [smem:[#allocation0]]
  $region57: #{random_point_sampling.1} parent=0
    _
  %s7 = ssub.s32 1, %s5
  %s8 = scalar_select 0, %s7, %s5
  loop: start=0, step=1, limit=4
  $region2: #{random_point_sampling.1} parent=0 // loop_pre_header
    _
  $region3: #{random_point_sampling.1} parent=0 // loop_header
    %s10 = sphi 0, %s14
    %p11 = scmp.ge.s32.totalorder %s10, 4
    %s20 = sphi 0, %s22
    %s23 = sphi 0, %s20
    %s24 = sphi 0, %s23
    %s40 = sphi 0, %s24
    %s46 = sphi 0, %s48
    %s49 = sphi 0, %s46
    %s50 = sphi 0, %s49
    %s66 = sphi 0, %s50
    %s72 = sphi 0, %s74
    %s75 = sphi 0, %s72
    %s76 = sphi 0, %s75
    %s92 = sphi 0, %s76
    %s98 = sphi 0, %s100
    %s101 = sphi 0, %s98
    %s102 = sphi 0, %s101
    %s118 = sphi 0, %s102
  $region4: #{random_point_sampling.1} parent=0 // loop_header_branch
    %13 = sbr.rel (%p11) target = $region8
  $region5: #{random_point_sampling.1} parent=0 // loop_body
    %s15 = ssub.s32 %s10, 1
    %s16 = ssub.s32 %s10, 2
    %s17 = sadd.s32 %s10, 1
    %s18 = ssub.s32 %s10, %s17
    %p19 = scmp.eq.s32.totalorder %s18, 0
    %s21 = sadd.s32 %s20, 1
    %s22 = scalar_select %p19, %s20, %s21
    %p25 = pneg %p19
    %p26 = scmp.eq.s32.totalorder %s10, 1
    %p27 = por %p25, %p26
    %p28 = scmp.ne.s32.totalorder %s20, %s23
    %p29 = scmp.eq.s32.totalorder %s10, 0
    %p30 = por %p28, %p29
    %p31 = scmp.ne.s32.totalorder %s20, %s23
    %p32 = scmp.eq.s32.totalorder %s15, 1
    %p33 = por %p31, %p32
    %p34 = scmp.ne.s32.totalorder %s23, %s24
    %p35 = scmp.eq.s32.totalorder %s15, 0
    %p36 = por %p34, %p35
    %p37 = scmp.ne.s32.totalorder %s23, %s24
    %p38 = scmp.eq.s32.totalorder %s16, 1
    %p39 = por %p37, %p38
    %p41 = scmp.ne.s32.totalorder %s24, %s40
    %p42 = scmp.eq.s32.totalorder %s16, 0
    %p43 = por %p41, %p42
    %s44 = ssub.s32 %s10, %s17
    %p45 = scmp.eq.s32.totalorder %s44, 0
    %s47 = sadd.s32 %s46, 1
    %s48 = scalar_select %p45, %s46, %s47
    %p51 = pneg %p45
    %p52 = scmp.eq.s32.totalorder %s10, 1
    %p53 = por %p51, %p52
    %p54 = scmp.ne.s32.totalorder %s46, %s49
    %p55 = scmp.eq.s32.totalorder %s10, 0
    %p56 = por %p54, %p55
    %p57 = scmp.ne.s32.totalorder %s46, %s49
    %p58 = scmp.eq.s32.totalorder %s15, 1
    %p59 = por %p57, %p58
    %p60 = scmp.ne.s32.totalorder %s49, %s50
    %p61 = scmp.eq.s32.totalorder %s15, 0
    %p62 = por %p60, %p61
    %p63 = scmp.ne.s32.totalorder %s49, %s50
    %p64 = scmp.eq.s32.totalorder %s16, 1
    %p65 = por %p63, %p64
    %p67 = scmp.ne.s32.totalorder %s50, %s66
    %p68 = scmp.eq.s32.totalorder %s16, 0
    %p69 = por %p67, %p68
    %s70 = ssub.s32 %s10, %s17
    %p71 = scmp.eq.s32.totalorder %s70, 0
    %s73 = sadd.s32 %s72, 1
    %s74 = scalar_select %p71, %s72, %s73
    %p77 = pneg %p71
    %p78 = scmp.eq.s32.totalorder %s10, 1
    %p79 = por %p77, %p78
    %p80 = scmp.ne.s32.totalorder %s72, %s75
    %p81 = scmp.eq.s32.totalorder %s10, 0
    %p82 = por %p80, %p81
    %p83 = scmp.ne.s32.totalorder %s72, %s75
    %p84 = scmp.eq.s32.totalorder %s15, 1
    %p85 = por %p83, %p84
    %p86 = scmp.ne.s32.totalorder %s75, %s76
    %p87 = scmp.eq.s32.totalorder %s15, 0
    %p88 = por %p86, %p87
    %p89 = scmp.ne.s32.totalorder %s75, %s76
    %p90 = scmp.eq.s32.totalorder %s16, 1
    %p91 = por %p89, %p90
    %p93 = scmp.ne.s32.totalorder %s76, %s92
    %p94 = scmp.eq.s32.totalorder %s16, 0
    %p95 = por %p93, %p94
    %s96 = ssub.s32 %s10, %s17
    %p97 = scmp.eq.s32.totalorder %s96, 0
    %s99 = sadd.s32 %s98, 1
    %s100 = scalar_select %p97, %s98, %s99
    %p103 = pneg %p97
    %p104 = scmp.eq.s32.totalorder %s10, 1
    %p105 = por %p103, %p104
    %p106 = scmp.ne.s32.totalorder %s98, %s101
    %p107 = scmp.eq.s32.totalorder %s10, 0
    %p108 = por %p106, %p107
    %p109 = scmp.ne.s32.totalorder %s98, %s101
    %p110 = scmp.eq.s32.totalorder %s15, 1
    %p111 = por %p109, %p110
    %p112 = scmp.ne.s32.totalorder %s101, %s102
    %p113 = scmp.eq.s32.totalorder %s15, 0
    %p114 = por %p112, %p113
    %p115 = scmp.ne.s32.totalorder %s101, %s102
    %p116 = scmp.eq.s32.totalorder %s16, 1
    %p117 = por %p115, %p116
    %p119 = scmp.ne.s32.totalorder %s102, %s118
    %p120 = scmp.eq.s32.totalorder %s16, 0
    %p121 = por %p119, %p120
    %p122 = scmp.le.s32.totalorder 1, %s10
    %p123 = scmp.lt.s32.totalorder %s10, 3
    %p124 = pnand %p122, %p123
    %p125 = pneg %p124
    // Predicated region
    $region9: #{random_point_sampling.1} parent=5 // pred_check
      _
    $region10: #{random_point_sampling.1} parent=5 // pred_check_branch
      %127 = sbr.rel (%p124) target = $region12
    $region11: #{random_point_sampling.1} parent=5 // pred_region
      %s128 = ssub.s32 %s10, 1
    $region12: #{random_point_sampling.1} parent=5 // pred_fallthru
      _
    %p129 = scmp.lt.s32.totalorder %s10, 2
    // Predicated region
    $region13: #{random_point_sampling.1} parent=5 // pred_check
      %p130 = pneg %p129
    $region14: #{random_point_sampling.1} parent=5 // pred_check_branch
      %132 = sbr.rel (%p130) target = $region16
    $region15: #{random_point_sampling.1} parent=5 // pred_region
      // Predicated region
      $region17: #{random_point_sampling.1} parent=15 // pred_check
        %p133 = pneg %p30
      $region18: #{random_point_sampling.1} parent=15 // pred_check_branch
        %135 = sbr.rel (%p133) target = $region20
      $region19: #{random_point_sampling.1} parent=15 // pred_region
        %p136 = scmp.lt.s32.totalorder %s10, 1
        %s137 = scalar_select %p136, %s10, 1
        %s138 = smul.addr %s137, 4
        %s139 = scalar_lea.vmem %s0, %s138
      $region20: #{random_point_sampling.1} parent=15 // pred_fallthru
        _
      // Predicated region
      $region21: #{random_point_sampling.1} parent=15 // pred_check
        %p140 = pneg %p56
      $region22: #{random_point_sampling.1} parent=15 // pred_check_branch
        %142 = sbr.rel (%p140) target = $region24
      $region23: #{random_point_sampling.1} parent=15 // pred_region
        %p143 = scmp.lt.s32.totalorder %s10, 1
        %s144 = scalar_select %p143, %s10, 1
        %s145 = scalar_lea.vmem %s1, %s144
      $region24: #{random_point_sampling.1} parent=15 // pred_fallthru
        _
    $region16: #{random_point_sampling.1} parent=5 // pred_fallthru
      _
    %p146 = scmp.le.s32.totalorder 1, %s10
    %p147 = scmp.lt.s32.totalorder %s10, 3
    %p148 = pnand %p146, %p147
    %p149 = pneg %p148
    // Predicated region
    $region25: #{random_point_sampling.1} parent=5 // pred_check
      _
    $region26: #{random_point_sampling.1} parent=5 // pred_check_branch
      %151 = sbr.rel (%p148) target = $region28
    $region27: #{random_point_sampling.1} parent=5 // pred_region
      %s152 = ssub.s32 %s10, 1
      %p153 = scmp.lt.s32.totalorder %s15, 1
      %s154 = scalar_select %p153, %s15, 1
      %s155 = smul.addr %s154, 4
      %s156 = scalar_lea.vmem %s0, %s155
      %p157 = pneg %p36
      %p158 = pneg %p33
      %p159 = scmp.lt.s32.totalorder %s15, 1
      %s160 = scalar_select %p159, %s15, 1
      %s161 = scalar_lea.vmem %s1, %s160
      %p162 = pneg %p62
      %p163 = pneg %p59
      %p164 = pneg %p88
      %p165 = pneg %p85
      %p166 = scmp.lt.s32.totalorder %s15, 1
      %s167 = scalar_select %p166, %s15, 1
      %s168 = scalar_lea.vmem %s2, %s167
      %p169 = pneg %p114
      %p170 = pneg %p111
      %p171 = scmp.lt.s32.totalorder %s15, 1
      %s172 = scalar_select %p171, %s15, 1
      %s173 = scalar_lea.vmem %s3, %s172
      %p174 = scmp.lt.s32.totalorder %s15, 1
      %s175 = scalar_select %p174, %s15, 1
      %s176 = smul.addr %s175, 4
      %s177 = scalar_lea.vmem %s0, %s176
      %p178 = scmp.lt.s32.totalorder %s15, 1
      %s179 = scalar_select %p178, %s15, 1
      %s180 = scalar_lea.vmem %s1, %s179
      %p181 = scmp.lt.s32.totalorder %s15, 1
      %s182 = scalar_select %p181, %s15, 1
      %s183 = scalar_lea.vmem %s2, %s182
      %p184 = scmp.lt.s32.totalorder %s15, 1
      %s185 = scalar_select %p184, %s15, 1
      %s186 = scalar_lea.vmem %s3, %s185
      %v187 = vld [vmem:[%s177] sm:$0x7]
      %v189 = vrot.slane %v187, 1
      %v191 = vadd.f32 %v187, %v189
      %v192 = vrot.slane %v187, 2
      %v194 = vadd.f32 %v191, %v192
      %vm195 = vcmp.ne.f32.partialorder %v194, 0.0
      %v196 = vsel %vm195, 1, 0
      %v197 = vcvt.s32.f32 %v196
      %v198 = vlaneseq
      %v199 = vand.u32 %v198, 127
      %200 = vrot.lane.b32.xlu0 %v197, 1
      %v201 = vpop.permute.xlu0 %200
      %vm202 = vcmp.ge.s32.totalorder %v199, 1
      %v203 = vsel %vm202, %v201, 0.0
      %v204 = vadd.f32 %v197, %v203
      %205 = vrot.lane.b32.xlu0 %v204, 2
      %v206 = vpop.permute.xlu0 %205
      %vm207 = vcmp.ge.s32.totalorder %v199, 2
      %v208 = vsel %vm207, %v206, 0.0
      %v209 = vadd.f32 %v204, %v208
      %210 = vrot.lane.b32.xlu0 %v209, 4
      %v211 = vpop.permute.xlu0 %210
      %vm212 = vcmp.ge.s32.totalorder %v199, 4
      %v213 = vsel %vm212, %v211, 0.0
      %v214 = vadd.f32 %v209, %v213
      %215 = vrot.lane.b32.xlu0 %v214, 8
      %v216 = vpop.permute.xlu0 %215
      %vm217 = vcmp.ge.s32.totalorder %v199, 8
      %v218 = vsel %vm217, %v216, 0.0
      %v219 = vadd.f32 %v214, %v218
      %220 = vrot.lane.b32.xlu0 %v219, 16
      %v221 = vpop.permute.xlu0 %220
      %vm222 = vcmp.ge.s32.totalorder %v199, 16
      %v223 = vsel %vm222, %v221, 0.0
      %v224 = vadd.f32 %v219, %v223
      %225 = vrot.lane.b32.xlu0 %v224, 32
      %v226 = vpop.permute.xlu0 %225
      %vm227 = vcmp.ge.s32.totalorder %v199, 32
      %v228 = vsel %vm227, %v226, 0.0
      %v229 = vadd.f32 %v224, %v228
      %230 = vrot.lane.b32.xlu0 %v229, 64
      %v231 = vpop.permute.xlu0 %230
      %vm232 = vcmp.ge.s32.totalorder %v199, 64
      %v233 = vsel %vm232, %v231, 0.0
      %v234 = vadd.f32 %v229, %v233
      %vm235 = vcmask 1040384
      %v236 = vsel %vm235, %v197, 0.0
      %237 = vadd.xlane.f32.xlu0 %v236
      %v238 = vpop.xlane.xlu0 %237
      %v239 = vrot.slane %v238, 4
      %v240 = vadd.f32 %v238, %v239
      %v241 = vrot.slane %v240, 2
      %v242 = vadd.f32 %v240, %v241
      %v243 = vrot.slane %v242, 1
      %v244 = vadd.f32 %v242, %v243
      %s245 = vtos %v244
      %vm246 = vcmp.gt.f32.partialorder %v197, 0.0
      %vm247 = vcmp.le.f32.partialorder %v234, 8.0
      %vm248 = vmand %vm246, %vm247
      %v249 = vsub.f32 %v234, 1.0
      %v250 = vsel %vm248, %v249, 8.0
      %v251 = vcvt.f32.s32.to.zero.pseudo %v250
      %252 = vst [vmem:[%s183] sm:$0x1] %v251
      %p253 = scmp.ge.f32.partialorder %s245, 8.0
      // Predicated region
      $region29: #{random_point_sampling.1} parent=27 // pred_check
        %p254 = pneg %p253
      $region30: #{random_point_sampling.1} parent=27 // pred_check_branch
        %256 = sbr.rel (%p254) target = $region32
      $region31: #{random_point_sampling.1} parent=27 // pred_region
        %257 = vst [vmem:[%s186] sm:$0x1] %v199
      $region32: #{random_point_sampling.1} parent=27 // pred_fallthru
        _
      %p258 = scmp.lt.f32.partialorder %s245, 8.0
      // Predicated region
      $region33: #{random_point_sampling.1} parent=27 // pred_check
        %p259 = pneg %p258
      $region34: #{random_point_sampling.1} parent=27 // pred_check_branch
        %261 = sbr.rel (%p259) target = $region36
      $region35: #{random_point_sampling.1} parent=27 // pred_region
        %s262 = smax.f32 %s245, 1.0
        %v263 = vld [vmem:[%s180] sm:$0x1]
        %v264 = vstv %s262
        %v265 = vmul.f32 %v263, %v264
        %v266 = vfloor.f32 %v265
        %s267 = ssub.f32 %s262, 1.0
        %v268 = vstv %s267
        %v269 = vmin.f32 %v266, %v268
        %v270 = vcvt.f32.s32.to.zero.pseudo %v269
        %271 = vst [vmem:[%s186] sm:$0x1] %v270
      $region36: #{random_point_sampling.1} parent=27 // pred_fallthru
        _
      %p272 = scmp.lt.s32.totalorder %s15, 1
      %s273 = scalar_select %p272, %s15, 1
      %s274 = scalar_lea.vmem %s2, %s273
      %p275 = scmp.lt.s32.totalorder %s15, 1
      %s276 = scalar_select %p275, %s15, 1
      %s277 = scalar_lea.vmem %s3, %s276
      // Predicated region
      $region37: #{random_point_sampling.1} parent=27 // pred_check
        %p278 = pneg %p85
      $region38: #{random_point_sampling.1} parent=27 // pred_check_branch
        %280 = sbr.rel (%p278) target = $region40
      $region39: #{random_point_sampling.1} parent=27 // pred_region
        _
      $region40: #{random_point_sampling.1} parent=27 // pred_fallthru
        _
      // Predicated region
      $region41: #{random_point_sampling.1} parent=27 // pred_check
        %p281 = pneg %p111
      $region42: #{random_point_sampling.1} parent=27 // pred_check_branch
        %283 = sbr.rel (%p281) target = $region44
      $region43: #{random_point_sampling.1} parent=27 // pred_region
        _
      $region44: #{random_point_sampling.1} parent=27 // pred_fallthru
        _
    $region28: #{random_point_sampling.1} parent=5 // pred_fallthru
      _
    %p284 = scmp.le.s32.totalorder 2, %s10
    // Predicated region
    $region45: #{random_point_sampling.1} parent=5 // pred_check
      %p285 = pneg %p284
    $region46: #{random_point_sampling.1} parent=5 // pred_check_branch
      %287 = sbr.rel (%p285) target = $region48
    $region47: #{random_point_sampling.1} parent=5 // pred_region
      %s288 = ssub.s32 %s10, 2
      // Predicated region
      $region49: #{random_point_sampling.1} parent=47 // pred_check
        %p289 = pneg %p91
      $region50: #{random_point_sampling.1} parent=47 // pred_check_branch
        %291 = sbr.rel (%p289) target = $region52
      $region51: #{random_point_sampling.1} parent=47 // pred_region
        %p292 = scmp.lt.s32.totalorder %s16, 1
        %s293 = scalar_select %p292, %s16, 1
        %s294 = scalar_lea.vmem %s2, %s293
      $region52: #{random_point_sampling.1} parent=47 // pred_fallthru
        _
      // Predicated region
      $region53: #{random_point_sampling.1} parent=47 // pred_check
        %p295 = pneg %p117
      $region54: #{random_point_sampling.1} parent=47 // pred_check_branch
        %297 = sbr.rel (%p295) target = $region56
      $region55: #{random_point_sampling.1} parent=47 // pred_region
        %p298 = scmp.lt.s32.totalorder %s16, 1
        %s299 = scalar_select %p298, %s16, 1
        %s300 = scalar_lea.vmem %s3, %s299
      $region56: #{random_point_sampling.1} parent=47 // pred_fallthru
        _
    $region48: #{random_point_sampling.1} parent=5 // pred_fallthru
      _
  $region6: #{random_point_sampling.1} parent=0 // loop_footer
    %s14 = sadd.s32 1, %s10
  $region7: #{random_point_sampling.1} parent=0 // loop_footer_branch
    %9 = sbr.rel target = $region3
  $region8: #{random_point_sampling.1} parent=0 // loop_exit
    _

</llo_original>
